<compile_context>
chip_gen: v6e
topology: v6e:2x2x1
jax: 0.10.0
libtpu: 0.0.40
codegen_flags: <defaults>
</compile_context>

<pallas_src>
import functools

import jax
import jax.numpy as jnp
from jax.experimental import pallas as pl
from jax.experimental.pallas import tpu as pltpu

_LANES = 128  # rays packed per row (lane axis)


def _round_up(x, m):
    return ((x + m - 1) // m) * m


def _cdiv(a, b):
    return (a + b - 1) // b


def _rgb_bg_loss_kernel(o_ref, t_ref, lam_ref, res_ref, sel_ref, acc_w_ref, acc_l_ref,
                        *, use_l1: bool, inner: int, r_valid_rows: int, needs_mask: bool):
    s = pl.program_id(0)           # split ("parallel") axis
    j = pl.program_id(1)           # reduction ("arbitrary") axis
    tile_rows, ck = o_ref.shape    # (tile_rows, C*128)
    k = lam_ref.shape[1]           # 128
    chans = ck // k                # C

    @pl.when(j == 0)
    def _init():
        # Channel-grouping selection matrix sel[C*r + c, r] = 1, built once per split
        # from two iotas (no HBM constant, no extra DMA / double-buffering of it).
        row = jax.lax.broadcasted_iota(jnp.int32, (ck, k), 0)
        col = jax.lax.broadcasted_iota(jnp.int32, (ck, k), 1)
        hit = (row >= col * chans) & (row < col * chans + chans)
        sel_ref[...] = jnp.where(hit, 1.0, 0.0).astype(sel_ref.dtype)
        acc_w_ref[...] = jnp.zeros_like(acc_w_ref)
        acc_l_ref[...] = jnp.zeros_like(acc_l_ref)

    o = o_ref[...].astype(jnp.float32)       # (T, C*128) lane-dense
    t = t_ref[...].astype(jnp.float32)       # (T, C*128)
    lam = lam_ref[...].astype(jnp.float32)   # (T, 128)

    diff = o - t
    elem = jnp.abs(diff) if use_l1 else diff * diff   # L1 / MSE, reduction='none'

    # Channel reduction on the (otherwise idle) MXU.  Packed lane p = C*r + c belongs
    # to ray r, so elem @ sel yields (T, 128) with lane r = sum_c elem[ray r, c],
    # aligned with lambda.  The f32 loss is split into bf16 hi/lo halves so two
    # single-pass bf16 matmuls reproduce the f32 result to ~2^-18 relative error,
    # instead of relying on 3-6 pass f32 MXU emulation (vex-slot cost on v7x).
    e_hi = elem.astype(jnp.bfloat16)
    e_lo = (elem - e_hi.astype(jnp.float32)).astype(jnp.bfloat16)
    sel = sel_ref[...]
    chan_sum = (jnp.dot(e_hi, sel, preferred_element_type=jnp.float32)
                + jnp.dot(e_lo, sel, preferred_element_type=jnp.float32))

    # weight = 1 / (1 + lambda_bg); exact reciprocal to preserve torch parity.
    w = pl.reciprocal(1.0 + lam, approx=False)
    weighted = chan_sum * w
    loglam = jnp.log(lam)

    if needs_mask:
        # Ragged tail: rows >= r_valid_rows hold stale VMEM garbage (the boundary DMA
        # is clamped).  Mask BEFORE accumulation so NaN/Inf from garbage never leaks.
        row0 = (s * inner + j) * tile_rows
        rows = jax.lax.broadcasted_iota(jnp.int32, (tile_rows, k), 0) + row0
        valid = rows < r_valid_rows
        weighted = jnp.where(valid, weighted, 0.0)
        loglam = jnp.where(valid, loglam, 0.0)

    # Full-vreg (8,128) accumulators: the leading-axis sum is pure VPU vreg adds;
    # the sublane+lane reduce happens only once, in the finalize.
    acc_w_ref[...] += weighted.reshape(tile_rows // 8, 8, k).sum(axis=0)
    acc_l_ref[...] += loglam.reshape(tile_rows // 8, 8, k).sum(axis=0)

    @pl.when(j == pl.num_programs(1) - 1)
    def _finalize():
        res_ref[0, 0] = jnp.sum(acc_w_ref[...])   # sum_rays (sum_c elem) / (1 + lam)
        res_ref[0, 1] = jnp.sum(acc_l_ref[...])   # sum_rays log(lam)


def _plan(r_packed, num_splits, tile_req, tile_max):
    """Pick (num_splits, inner, tile_rows) so coverage hugs r_packed (no 2x overshoot)
    and the first block of every split starts in bounds."""
    num_splits = max(1, min(num_splits, max(1, r_packed // 8)))
    while True:
        per = _cdiv(r_packed, num_splits)
        tile = max(8, min(tile_req, tile_max, _round_up(per, 8)))
        inner = _cdiv(per, tile)
        tile = _round_up(_cdiv(per, inner), 8)      # shrink back toward exact coverage
        if num_splits == 1 or (num_splits - 1) * inner * tile < r_packed:
            return num_splits, inner, tile
        num_splits -= 1


def rgb_with_background(outputs, targets, lambda_bg, *, use_l1: bool = False,
                        tile_rows: int = 4096, num_splits=None):
    """JAX/Pallas port of RGBWithBackground.forward.

    outputs, targets: [..., C]; lambda_bg: [...] (one positive scalar per ray).
    `tile_rows` is an upper bound; the real tile is sized from VMEM capacity.
    """
    C = outputs.shape[-1]
    o2 = outputs.reshape(-1, C)
    t2 = targets.reshape(-1, C)
    lam1 = lambda_bg.reshape(-1)
    n_rays = o2.shape[0]
    assert lam1.shape[0] == n_rays
    K = _LANES

    # Ragged tail: pad only up to the next multiple of 128 rays (needed for the free
    # lane-dense reshape).  128-aligned ray counts take a zero-copy path.
    # TODO(synk): stream a <128-ray tail without this (one-off) pad copy.
    pad_rays = (-n_rays) % K
    if pad_rays:
        o2 = jnp.pad(o2, ((0, pad_rays), (0, 0)))
        t2 = jnp.pad(t2, ((0, pad_rays), (0, 0)))
        lam1 = jnp.pad(lam1, ((0, pad_rays),), constant_values=1.0)  # elem=0, log(1)=0
    r_packed = (n_rays + pad_rays) // K

    # Free, row-major reshapes to the lane-dense layout (no HBM copy).
    o_packed = o2.reshape(r_packed, C * K)
    t_packed = t2.reshape(r_packed, C * K)
    lam_packed = lam1.reshape(r_packed, K)

    # ---- chip-aware sizing --------------------------------------------------
    vmem_cap = 64 * 2**20                       # conservative fallback (v7x per-core)
    try:
        vmem_cap = pltpu.get_tpu_info().vmem_capacity_bytes
    except Exception:
        pass
    if num_splits is None:
        num_splits = 1
        try:
            if "v7" in jax.local_devices()[0].device_kind.lower():
                num_splits = 2                  # two TensorCores per chip on v7x
        except Exception:
            pass

    row_stream_bytes = (2 * C + 1) * K * 4                    # o + t + lam per packed row (f32)
    row_live_bytes = 2 * row_stream_bytes + 6 * C * K * 4     # dbl-buffered inputs + f32 temps
    vmem_limit = int(min(0.8 * vmem_cap, 80 * 2**20))
    tile_max = max(8, (int(0.6 * vmem_limit) // row_live_bytes) // 8 * 8)

    num_splits, inner, tile_rows = _plan(r_packed, num_splits, tile_rows, tile_max)
    coverage = num_splits * inner * tile_rows
    needs_mask = coverage != r_packed

    # Never point a DMA at a block that starts out of bounds: clamp the block index;
    # the in-kernel row mask zeroes any re-read/garbage rows.
    last_blk = (r_packed - 1) // tile_rows
    row_map = lambda s, j: (jnp.minimum(s * inner + j, last_blk), 0)

    kernel = functools.partial(_rgb_bg_loss_kernel, use_l1=use_l1, inner=inner,
                               r_valid_rows=r_packed, needs_mask=needs_mask)

    cost = pl.CostEstimate(
        flops=r_packed * (8 * C * K + 2 * 2 * C * K * K),   # elementwise + 2 bf16 matmul passes
        transcendentals=r_packed * K,                       # log per ray
        bytes_accessed=r_packed * row_stream_bytes + num_splits * 8,
    )

    partials = pl.pallas_call(
        kernel,
        out_shape=jax.ShapeDtypeStruct((num_splits, 2), jnp.float32),
        grid_spec=pltpu.PrefetchScalarGridSpec(
            num_scalar_prefetch=0,
            grid=(num_splits, inner),
            in_specs=[
                pl.BlockSpec((tile_rows, C * K), row_map),
                pl.BlockSpec((tile_rows, C * K), row_map),
                pl.BlockSpec((tile_rows, K), row_map),
            ],
            out_specs=pl.BlockSpec((1, 2), lambda s, j: (s, 0),
                                   memory_space=pltpu.MemorySpace.SMEM),
            scratch_shapes=[
                pltpu.VMEM((C * K, K), jnp.bfloat16),   # sel matrix, built in-kernel
                pltpu.VMEM((8, K), jnp.float32),        # weighted-error accumulator
                pltpu.VMEM((8, K), jnp.float32),        # log-lambda accumulator
            ],
        ),
        compiler_params=pltpu.CompilerParams(
            dimension_semantics=("parallel", "arbitrary"),
            vmem_limit_bytes=vmem_limit),
        cost_estimate=cost,
    )(o_packed, t_packed, lam_packed)

    w_sum = jnp.sum(partials[:, 0])
    l_sum = jnp.sum(partials[:, 1])
    n = jnp.float32(n_rays)
    return w_sum / (C * n) + l_sum / n


def _reference(outputs, targets, lambda_bg, *, use_l1: bool = False):
    diff = outputs.astype(jnp.float32) - targets.astype(jnp.float32)
    elem = jnp.abs(diff) if use_l1 else diff * diff
    weighted = jnp.mean(elem, axis=-1) / (1.0 + lambda_bg.astype(jnp.float32))
    return jnp.mean(weighted) + jnp.mean(jnp.log(lambda_bg.astype(jnp.float32)))


if __name__ == "__main__":
    key = jax.random.PRNGKey(0)
    k1, k2, k3 = jax.random.split(key, 3)

    B, R, C = 2, 2048, 3   # 4096 rays -> 32 lane-dense rows of 128 rays (zero-copy path)
    outputs = jax.random.uniform(k1, (B, R, C), dtype=jnp.float32)
    targets = jax.random.uniform(k2, (B, R, C), dtype=jnp.float32)
    lambda_bg = jax.random.uniform(k3, (B, R), dtype=jnp.float32) + 0.05  # > 0 for log

    for use_l1 in (False, True):
        # 1) default, auto-sized config
        out = jax.block_until_ready(
            rgb_with_background(outputs, targets, lambda_bg, use_l1=use_l1))
        ref = _reference(outputs, targets, lambda_bg, use_l1=use_l1)
        assert jnp.allclose(out, ref, rtol=1e-5, atol=1e-5), (use_l1, out, ref)

        # 2) tiny tiles + 2 splits on 2176 rays (17 packed rows): exercises
        #    init/accumulate/finalize across the grid AND the ragged-tile row mask.
        o_s, t_s, l_s = outputs[:, :1088], targets[:, :1088], lambda_bg[:, :1088]
        out = jax.block_until_ready(
            rgb_with_background(o_s, t_s, l_s, use_l1=use_l1, tile_rows=8, num_splits=2))
        ref = _reference(o_s, t_s, l_s, use_l1=use_l1)
        assert jnp.allclose(out, ref, rtol=1e-5, atol=1e-5), (use_l1, out, ref)

        # 3) ray count not a multiple of 128: exercises the minimal pad fallback.
        o_m, t_m, l_m = outputs[:, :1000], targets[:, :1000], lambda_bg[:, :1000]
        out = jax.block_until_ready(
            rgb_with_background(o_m, t_m, l_m, use_l1=use_l1))
        ref = _reference(o_m, t_m, l_m, use_l1=use_l1)
        assert jnp.allclose(out, ref, rtol=1e-5, atol=1e-5), (use_l1, out, ref)

    print("KERNEL_OK")
</pallas_src>

<mosaic_0001>
module attributes {stable_mosaic.version = 11 : i64} {
  func.func @_rgb_bg_loss_kernel(%arg0: i32, %arg1: i32, %arg2: memref<32x384xf32, #tpu.memory_space<vmem>>, %arg3: memref<32x384xf32, #tpu.memory_space<vmem>>, %arg4: memref<32x128xf32, #tpu.memory_space<vmem>>, %arg5: memref<1x2xf32, #tpu.memory_space<smem>>, %arg6: memref<384x128xbf16, #tpu.memory_space<vmem>>, %arg7: memref<8x128xf32, #tpu.memory_space<vmem>>, %arg8: memref<8x128xf32, #tpu.memory_space<vmem>>) attributes {dimension_semantics = [#tpu.dimension_semantics<parallel>, #tpu.dimension_semantics<arbitrary>], iteration_bounds = array<i64: 1, 1>, scalar_prefetch = 0 : i64, scratch_operands = 3 : i64, tpu.core_type = #tpu.core_type<tc>, window_params = [{transform_indices = @transform_0, window_bounds = array<i64: 32, 384>}, {transform_indices = @transform_1, window_bounds = array<i64: 32, 384>}, {transform_indices = @transform_2, window_bounds = array<i64: 32, 128>}, {transform_indices = @transform_3, window_bounds = array<i64: 1, 2>}]} {
    %c0_i32 = arith.constant 0 : i32
    %0 = arith.cmpi eq, %arg1, %c0_i32 : i32
    %1 = arith.extui %0 : i1 to i32
    %c0_i32_0 = arith.constant 0 : i32
    %2 = arith.cmpi ne, %1, %c0_i32_0 : i32
    scf.if %2 {
      %34 = tpu.iota {dimensions = array<i32: 0>} : vector<384x128xi32>
      %35 = tpu.iota {dimensions = array<i32: 1>} : vector<384x128xi32>
      %c3_i32 = arith.constant 3 : i32
      %36 = vector.broadcast %c3_i32 : i32 to vector<384x128xi32>
      %37 = arith.muli %35, %36 : vector<384x128xi32>
      %38 = arith.cmpi sge, %34, %37 : vector<384x128xi32>
      %c3_i32_22 = arith.constant 3 : i32
      %39 = vector.broadcast %c3_i32_22 : i32 to vector<384x128xi32>
      %40 = arith.muli %35, %39 : vector<384x128xi32>
      %c3_i32_23 = arith.constant 3 : i32
      %41 = vector.broadcast %c3_i32_23 : i32 to vector<384x128xi32>
      %42 = arith.addi %40, %41 : vector<384x128xi32>
      %43 = arith.cmpi slt, %34, %42 : vector<384x128xi32>
      %44 = arith.andi %38, %43 : vector<384x128xi1>
      %cst_24 = arith.constant 1.000000e+00 : f32
      %cst_25 = arith.constant 0.000000e+00 : f32
      %45 = vector.broadcast %cst_24 : f32 to vector<384x128xf32>
      %46 = vector.broadcast %cst_25 : f32 to vector<384x128xf32>
      %47 = arith.select %44, %45, %46 : vector<384x128xi1>, vector<384x128xf32>
      %48 = arith.truncf %47 : vector<384x128xf32> to vector<384x128xbf16>
      %c0_26 = arith.constant 0 : index
      %c0_27 = arith.constant 0 : index
      %49 = vector.load %arg6[%c0_26, %c0_27] : memref<384x128xbf16, #tpu.memory_space<vmem>>, vector<384x128xbf16>
      tpu.vector_store %arg6[%c0_26, %c0_27], %48 {strides = array<i32>} : memref<384x128xbf16, #tpu.memory_space<vmem>>, vector<384x128xbf16>,
      %cst_28 = arith.constant 0.000000e+00 : f32
      %50 = vector.broadcast %cst_28 : f32 to vector<8x128xf32>
      %c0_29 = arith.constant 0 : index
      %c0_30 = arith.constant 0 : index
      %51 = vector.load %arg7[%c0_29, %c0_30] : memref<8x128xf32, #tpu.memory_space<vmem>>, vector<8x128xf32>
      tpu.vector_store %arg7[%c0_29, %c0_30], %50 {strides = array<i32>} : memref<8x128xf32, #tpu.memory_space<vmem>>, vector<8x128xf32>,
      %cst_31 = arith.constant 0.000000e+00 : f32
      %52 = vector.broadcast %cst_31 : f32 to vector<8x128xf32>
      %c0_32 = arith.constant 0 : index
      %c0_33 = arith.constant 0 : index
      %53 = vector.load %arg8[%c0_32, %c0_33] : memref<8x128xf32, #tpu.memory_space<vmem>>, vector<8x128xf32>
      tpu.vector_store %arg8[%c0_32, %c0_33], %52 {strides = array<i32>} : memref<8x128xf32, #tpu.memory_space<vmem>>, vector<8x128xf32>,
    } else {
    }
    %c0 = arith.constant 0 : index
    %c0_1 = arith.constant 0 : index
    %3 = vector.load %arg2[%c0, %c0_1] : memref<32x384xf32, #tpu.memory_space<vmem>>, vector<32x384xf32>
    %c0_2 = arith.constant 0 : index
    %c0_3 = arith.constant 0 : index
    %4 = vector.load %arg3[%c0_2, %c0_3] : memref<32x384xf32, #tpu.memory_space<vmem>>, vector<32x384xf32>
    %c0_4 = arith.constant 0 : index
    %c0_5 = arith.constant 0 : index
    %5 = vector.load %arg4[%c0_4, %c0_5] : memref<32x128xf32, #tpu.memory_space<vmem>>, vector<32x128xf32>
    %6 = arith.subf %3, %4 : vector<32x384xf32>
    %7 = arith.mulf %6, %6 : vector<32x384xf32>
    %8 = arith.truncf %7 : vector<32x384xf32> to vector<32x384xbf16>
    %9 = arith.extf %8 : vector<32x384xbf16> to vector<32x384xf32>
    %10 = arith.subf %7, %9 : vector<32x384xf32>
    %11 = arith.truncf %10 : vector<32x384xf32> to vector<32x384xbf16>
    %c0_6 = arith.constant 0 : index
    %c0_7 = arith.constant 0 : index
    %12 = vector.load %arg6[%c0_6, %c0_7] : memref<384x128xbf16, #tpu.memory_space<vmem>>, vector<384x128xbf16>
    %cst = arith.constant dense<0.000000e+00> : vector<32x128xf32>
    %13 = tpu.matmul %8, %12, %cst {dimension_numbers = #tpu.dot_dimension_numbers<[1], [0], [0], [1], [0, 0, 1, 1], [], []>} : vector<32x384xbf16>, vector<384x128xbf16>, vector<32x128xf32> -> vector<32x128xf32>
    %cst_8 = arith.constant dense<0.000000e+00> : vector<32x128xf32>
    %14 = tpu.matmul %11, %12, %cst_8 {dimension_numbers = #tpu.dot_dimension_numbers<[1], [0], [0], [1], [0, 0, 1, 1], [], []>} : vector<32x384xbf16>, vector<384x128xbf16>, vector<32x128xf32> -> vector<32x128xf32>
    %15 = arith.addf %13, %14 : vector<32x128xf32>
    %cst_9 = arith.constant 1.000000e+00 : f32
    %16 = vector.broadcast %cst_9 : f32 to vector<32x128xf32>
    %17 = arith.addf %16, %5 : vector<32x128xf32>
    %18 = tpu.reciprocal %17 : vector<32x128xf32> -> vector<32x128xf32>
    %19 = arith.mulf %15, %18 : vector<32x128xf32>
    %20 = math.log %5 : vector<32x128xf32>
    %c0_10 = arith.constant 0 : index
    %c0_11 = arith.constant 0 : index
    %21 = vector.load %arg7[%c0_10, %c0_11] : memref<8x128xf32, #tpu.memory_space<vmem>>, vector<8x128xf32>
    %22 = vector.shape_cast %19 : vector<32x128xf32> to vector<4x8x128xf32>
    %cst_12 = arith.constant dense<0.000000e+00> : vector<8x128xf32>
    %23 = vector.multi_reduction <add>, %22, %cst_12 [0] : vector<4x8x128xf32> to vector<8x128xf32>
    %24 = arith.addf %21, %23 : vector<8x128xf32>
    %c0_13 = arith.constant 0 : index
    %c0_14 = arith.constant 0 : index
    %25 = vector.load %arg7[%c0_13, %c0_14] : memref<8x128xf32, #tpu.memory_space<vmem>>, vector<8x128xf32>
    tpu.vector_store %arg7[%c0_13, %c0_14], %24 {strides = array<i32>} : memref<8x128xf32, #tpu.memory_space<vmem>>, vector<8x128xf32>,
    %c0_15 = arith.constant 0 : index
    %c0_16 = arith.constant 0 : index
    %26 = vector.load %arg8[%c0_15, %c0_16] : memref<8x128xf32, #tpu.memory_space<vmem>>, vector<8x128xf32>
    %27 = vector.shape_cast %20 : vector<32x128xf32> to vector<4x8x128xf32>
    %cst_17 = arith.constant dense<0.000000e+00> : vector<8x128xf32>
    %28 = vector.multi_reduction <add>, %27, %cst_17 [0] : vector<4x8x128xf32> to vector<8x128xf32>
    %29 = arith.addf %26, %28 : vector<8x128xf32>
    %c0_18 = arith.constant 0 : index
    %c0_19 = arith.constant 0 : index
    %30 = vector.load %arg8[%c0_18, %c0_19] : memref<8x128xf32, #tpu.memory_space<vmem>>, vector<8x128xf32>
    tpu.vector_store %arg8[%c0_18, %c0_19], %29 {strides = array<i32>} : memref<8x128xf32, #tpu.memory_space<vmem>>, vector<8x128xf32>,
    %c0_i32_20 = arith.constant 0 : i32
    %31 = arith.cmpi eq, %arg1, %c0_i32_20 : i32
    %32 = arith.extui %31 : i1 to i32
    %c0_i32_21 = arith.constant 0 : i32
    %33 = arith.cmpi ne, %32, %c0_i32_21 : i32
    scf.if %33 {
      %c0_22 = arith.constant 0 : index
      %c0_23 = arith.constant 0 : index
      %34 = vector.load %arg7[%c0_22, %c0_23] : memref<8x128xf32, #tpu.memory_space<vmem>>, vector<8x128xf32>
      %35 = vector.shape_cast %34 : vector<8x128xf32> to vector<1x8x128xf32>
      %cst_24 = arith.constant dense<0.000000e+00> : vector<1xf32>
      %36 = vector.multi_reduction <add>, %35, %cst_24 [1, 2] : vector<1x8x128xf32> to vector<1xf32>
      %37 = vector.shape_cast %36 : vector<1xf32> to vector<1x1x1xf32>
      %38 = vector.extract %37[0, 0, 0] : f32 from vector<1x1x1xf32>
      %c0_25 = arith.constant 0 : index
      %c0_26 = arith.constant 0 : index
      %39 = memref.load %arg5[%c0_25, %c0_26] : memref<1x2xf32, #tpu.memory_space<smem>>
      memref.store %38, %arg5[%c0_25, %c0_26] : memref<1x2xf32, #tpu.memory_space<smem>>
      %c0_27 = arith.constant 0 : index
      %c0_28 = arith.constant 0 : index
      %40 = vector.load %arg8[%c0_27, %c0_28] : memref<8x128xf32, #tpu.memory_space<vmem>>, vector<8x128xf32>
      %41 = vector.shape_cast %40 : vector<8x128xf32> to vector<1x8x128xf32>
      %cst_29 = arith.constant dense<0.000000e+00> : vector<1xf32>
      %42 = vector.multi_reduction <add>, %41, %cst_29 [1, 2] : vector<1x8x128xf32> to vector<1xf32>
      %43 = vector.shape_cast %42 : vector<1xf32> to vector<1x1x1xf32>
      %44 = vector.extract %43[0, 0, 0] : f32 from vector<1x1x1xf32>
      %c0_30 = arith.constant 0 : index
      %c1 = arith.constant 1 : index
      %45 = memref.load %arg5[%c0_30, %c1] : memref<1x2xf32, #tpu.memory_space<smem>>
      memref.store %44, %arg5[%c0_30, %c1] : memref<1x2xf32, #tpu.memory_space<smem>>
    } else {
    }
    return
  }
  func.func @transform_0(%arg0: i32, %arg1: i32) -> (i32, i32) {
    %c1_i32 = arith.constant 1 : i32
    %0 = arith.muli %arg0, %c1_i32 : i32
    %1 = arith.addi %0, %arg1 : i32
    %c0_i32 = arith.constant 0 : i32
    %2 = arith.minsi %1, %c0_i32 : i32
    %c0_i32_0 = arith.constant 0 : i32
    %c0_i32_1 = arith.constant 0 : i32
    return %2, %c0_i32_0 : i32, i32
  }
  func.func @transform_1(%arg0: i32, %arg1: i32) -> (i32, i32) {
    %c1_i32 = arith.constant 1 : i32
    %0 = arith.muli %arg0, %c1_i32 : i32
    %1 = arith.addi %0, %arg1 : i32
    %c0_i32 = arith.constant 0 : i32
    %2 = arith.minsi %1, %c0_i32 : i32
    %c0_i32_0 = arith.constant 0 : i32
    %c0_i32_1 = arith.constant 0 : i32
    return %2, %c0_i32_0 : i32, i32
  }
  func.func @transform_2(%arg0: i32, %arg1: i32) -> (i32, i32) {
    %c1_i32 = arith.constant 1 : i32
    %0 = arith.muli %arg0, %c1_i32 : i32
    %1 = arith.addi %0, %arg1 : i32
    %c0_i32 = arith.constant 0 : i32
    %2 = arith.minsi %1, %c0_i32 : i32
    %c0_i32_0 = arith.constant 0 : i32
    %c0_i32_1 = arith.constant 0 : i32
    return %2, %c0_i32_0 : i32, i32
  }
  func.func @transform_3(%arg0: i32, %arg1: i32) -> (i32, i32) {
    %c0_i32 = arith.constant 0 : i32
    %c0_i32_0 = arith.constant 0 : i32
    return %arg0, %c0_i32 : i32, i32
  }
}

</mosaic_0001>

<llo_original>
// kernel: tpu_custom_call.1
$region0: #{tpu_custom_call.1}
  #allocation0 [shape = 'u32[]', space=smem, size = 0x4, offset = 0x4, fixed_abs, tag = 'smem constant byte address 0x4 - core index']
  #allocation1 [shape = 'u32[144,128]{1,0:T(1,128)}', space=vmem, size = 0x12000, scoped, tag = 'internal scratch']
  #allocation2 [shape = 'bf16[384,128]{1,0:T(8,128)(2,1)}', space=vmem, size = 0x18000, scoped, tag = 'scratch operand']
  #allocation3 [shape = 'f32[8,128]{1,0:T(8,128)}', space=vmem, size = 0x1000, scoped, tag = 'scratch operand']
  #allocation4 [shape = 'f32[8,128]{1,0:T(8,128)}', space=vmem, size = 0x1000, scoped, tag = 'scratch operand']
  %s0 = inlined_call_operand.hbm [shape: f32[32,384], index: 0, kind: input, shape index: {}]
  %s1 = inlined_call_operand.hbm [shape: f32[32,384], index: 1, kind: input, shape index: {}]
  %s2 = inlined_call_operand.hbm [shape: f32[32,128], index: 2, kind: input, shape index: {}]
  %s3 = inlined_call_operand.hbm [shape: f32[1,2], index: 3, kind: output, shape index: {}]
  %s4 = sld [smem:[#allocation0]]
  $region42: #{tpu_custom_call.1} parent=0
    _
  %s6 = ssub.s32 1, %s4
  %s7 = scalar_select 0, %s6, %s4
  $region1: #{tpu_custom_call.1} parent=0
    #allocation5 [shape = 'u8[49152]{0}', space=vmem, size = 0xc000, scoped, tag = 'input window, operand 0, single buffered']
    #allocation6 [shape = 's32[1]{0}', space=sflag, size = 0x4, scoped, tag = 'scoped memory for tpu_custom_call.1']
    #allocation7 [shape = 's32[1]{0}', space=sflag, size = 0x4, scoped, tag = 'scoped memory for tpu_custom_call.1']
    #allocation8 [shape = 'u8[49152]{0}', space=vmem, size = 0xc000, scoped, tag = 'input window, operand 1, single buffered']
    #allocation9 [shape = 's32[1]{0}', space=sflag, size = 0x4, scoped, tag = 'scoped memory for tpu_custom_call.1']
    #allocation10 [shape = 'u8[16384]{0}', space=vmem, size = 0x4000, scoped, tag = 'input window, operand 2, single buffered']
    #allocation11 [shape = 'u8[512]{0}', space=smem, size = 0x200, scoped, tag = 'output window, operand 0, single buffered']
    %8 = vsyncpa [#allocation6], 0
    %9 = vsyncpa [#allocation9], 0
    %10 = vsyncpa [#allocation7], 0
    // Predicated region
    $region2: #{tpu_custom_call.1} parent=1 // pred_check
      _
    $region3: #{tpu_custom_call.1} parent=1 // pred_check_branch
      %12 = sbr.rel (0) target = $region5
    $region4: #{tpu_custom_call.1} parent=1 // pred_region
      %s13 = sadd.s32 0, 0
      %p14 = scmp.lt.s32.totalorder %s13, 0
      %s15 = scalar_select %p14, %s13, 0
      %s16 = smul.u32 4, %s15
      %s18 = ssub.s32 1536, 1536
      %19 = vsyncadd [#allocation6], %s18
      %s20 = smul.addr %s16, 3
      %s21 = smul.addr %s20, 128
      %s22 = scalar_lea.hbm %s0, %s21
      %s23 = sshll.u32 [#allocation5], 4
      %s24 = int_to_ptr.vmem [resolvable:$true] %s23
      %29 = dma.hbm_to_vmem [thread:$0]  %s22, 1536, %s24, [#allocation6], 384, 384, 24
    $region5: #{tpu_custom_call.1} parent=1 // pred_fallthru
      _
    // Predicated region
    $region6: #{tpu_custom_call.1} parent=1 // pred_check
      _
    $region7: #{tpu_custom_call.1} parent=1 // pred_check_branch
      %31 = sbr.rel (0) target = $region9
    $region8: #{tpu_custom_call.1} parent=1 // pred_region
      %s32 = sadd.s32 0, 0
      %p33 = scmp.lt.s32.totalorder %s32, 0
      %s34 = scalar_select %p33, %s32, 0
      %s35 = smul.u32 4, %s34
      %s37 = ssub.s32 1536, 1536
      %38 = vsyncadd [#allocation9], %s37
      %s39 = smul.addr %s35, 3
      %s40 = smul.addr %s39, 128
      %s41 = scalar_lea.hbm %s1, %s40
      %s42 = sshll.u32 [#allocation8], 4
      %s43 = int_to_ptr.vmem [resolvable:$true] %s42
      %48 = dma.hbm_to_vmem [thread:$0]  %s41, 1536, %s43, [#allocation9], 384, 384, 24
    $region9: #{tpu_custom_call.1} parent=1 // pred_fallthru
      _
    // Predicated region
    $region10: #{tpu_custom_call.1} parent=1 // pred_check
      _
    $region11: #{tpu_custom_call.1} parent=1 // pred_check_branch
      %50 = sbr.rel (0) target = $region13
    $region12: #{tpu_custom_call.1} parent=1 // pred_region
      %s51 = sadd.s32 0, 0
      %p52 = scmp.lt.s32.totalorder %s51, 0
      %s53 = scalar_select %p52, %s51, 0
      %s54 = smul.u32 4, %s53
      %s56 = ssub.s32 512, 512
      %57 = vsyncadd [#allocation9], %s56
      %s58 = smul.addr %s54, 128
      %s59 = scalar_lea.hbm %s2, %s58
      %s60 = sshll.u32 [#allocation10], 4
      %s61 = int_to_ptr.vmem [resolvable:$true] %s60
      %66 = dma.hbm_to_vmem [thread:$0]  %s59, 512, %s61, [#allocation9], 128, 128, 8
    $region13: #{tpu_custom_call.1} parent=1 // pred_fallthru
      _
    // Predicated region
    $region14: #{tpu_custom_call.1} parent=1 // pred_check
      _
    $region15: #{tpu_custom_call.1} parent=1 // pred_check_branch
      %68 = sbr.rel (0) target = $region17
    $region16: #{tpu_custom_call.1} parent=1 // pred_region
      %69 = dma.done [#allocation6], 1536
    $region17: #{tpu_custom_call.1} parent=1 // pred_fallthru
      _
    // Predicated region
    $region18: #{tpu_custom_call.1} parent=1 // pred_check
      _
    $region19: #{tpu_custom_call.1} parent=1 // pred_check_branch
      %71 = sbr.rel (0) target = $region21
    $region20: #{tpu_custom_call.1} parent=1 // pred_region
      %72 = dma.done [#allocation9], 1536
    $region21: #{tpu_custom_call.1} parent=1 // pred_fallthru
      _
    // Predicated region
    $region22: #{tpu_custom_call.1} parent=1 // pred_check
      _
    $region23: #{tpu_custom_call.1} parent=1 // pred_check_branch
      %74 = sbr.rel (0) target = $region25
    $region24: #{tpu_custom_call.1} parent=1 // pred_region
      %75 = dma.done [#allocation9], 512
    $region25: #{tpu_custom_call.1} parent=1 // pred_fallthru
      _
    %s76 = sadd.s32 0, 0
    %p77 = scmp.lt.s32.totalorder %s76, 0
    %s78 = scalar_select %p77, %s76, 0
    %s79 = smul.u32 4, %s78
    %s80 = sadd.s32 0, 0
    %p81 = scmp.lt.s32.totalorder %s80, 0
    %s82 = scalar_select %p81, %s80, 0
    %s83 = smul.u32 4, %s82
    %s84 = sadd.s32 0, 0
    %p85 = scmp.lt.s32.totalorder %s84, 0
    %s86 = scalar_select %p85, %s84, 0
    %s87 = smul.u32 4, %s86
    %p89 = scmp.eq.s32.totalorder 0, 0
    // Predicated region
    $region26: #{tpu_custom_call.1} parent=1 // pred_check
      %p90 = pneg %p89
    $region27: #{tpu_custom_call.1} parent=1 // pred_check_branch
      %92 = sbr.rel (%p90) target = $region29
    $region28: #{tpu_custom_call.1} parent=1 // pred_region
      %v93 = vlaneseq
      %v94 = vshrl.u32 %v93, 7
      %v95 = vadd.s32 %v94, 8
      %v96 = vadd.s32 %v94, 16
      %v97 = vadd.s32 %v94, 24
      %v98 = vadd.s32 %v94, 32
      %v99 = vadd.s32 %v94, 40
      %v100 = vadd.s32 %v94, 48
      %v101 = vadd.s32 %v94, 56
      %v102 = vadd.s32 %v94, 64
      %v103 = vadd.s32 %v94, 72
      %v104 = vadd.s32 %v94, 80
      %v105 = vadd.s32 %v94, 88
      %v106 = vadd.s32 %v94, 96
      %v107 = vadd.s32 %v94, 104
      %v108 = vadd.s32 %v94, 112
      %v109 = vadd.s32 %v94, 120
      %v110 = vadd.s32 %v94, 128
      %v111 = vadd.s32 %v94, 136
      %v112 = vadd.s32 %v94, 144
      %v113 = vadd.s32 %v94, 152
      %v114 = vadd.s32 %v94, 160
      %v115 = vadd.s32 %v94, 168
      %v116 = vadd.s32 %v94, 176
      %v117 = vadd.s32 %v94, 184
      %v118 = vadd.s32 %v94, 192
      %v119 = vadd.s32 %v94, 200
      %v120 = vadd.s32 %v94, 208
      %v121 = vadd.s32 %v94, 216
      %v122 = vadd.s32 %v94, 224
      %v123 = vadd.s32 %v94, 232
      %v124 = vadd.s32 %v94, 240
      %v125 = vadd.s32 %v94, 248
      %v126 = vadd.s32 %v94, 256
      %v127 = vadd.s32 %v94, 264
      %v128 = vadd.s32 %v94, 272
      %v129 = vadd.s32 %v94, 280
      %v130 = vadd.s32 %v94, 288
      %v131 = vadd.s32 %v94, 296
      %v132 = vadd.s32 %v94, 304
      %v133 = vadd.s32 %v94, 312
      %v134 = vadd.s32 %v94, 320
      %v135 = vadd.s32 %v94, 328
      %v136 = vadd.s32 %v94, 336
      %v137 = vadd.s32 %v94, 344
      %v138 = vadd.s32 %v94, 352
      %v139 = vadd.s32 %v94, 360
      %v140 = vadd.s32 %v94, 368
      %v141 = vadd.s32 %v94, 376
      %v142 = vlaneseq
      %v143 = vand.u32 %v142, 127
      %v144 = vmul.u32 %v143, 3
      %vm145 = vcmp.ge.s32.totalorder %v94, %v144
      %vm146 = vcmp.ge.s32.totalorder %v95, %v144
      %vm147 = vcmp.ge.s32.totalorder %v96, %v144
      %vm148 = vcmp.ge.s32.totalorder %v97, %v144
      %vm149 = vcmp.ge.s32.totalorder %v98, %v144
      %vm150 = vcmp.ge.s32.totalorder %v99, %v144
      %vm151 = vcmp.ge.s32.totalorder %v100, %v144
      %vm152 = vcmp.ge.s32.totalorder %v101, %v144
      %vm153 = vcmp.ge.s32.totalorder %v102, %v144
      %vm154 = vcmp.ge.s32.totalorder %v103, %v144
      %vm155 = vcmp.ge.s32.totalorder %v104, %v144
      %vm156 = vcmp.ge.s32.totalorder %v105, %v144
      %vm157 = vcmp.ge.s32.totalorder %v106, %v144
      %vm158 = vcmp.ge.s32.totalorder %v107, %v144
      %vm159 = vcmp.ge.s32.totalorder %v108, %v144
      %vm160 = vcmp.ge.s32.totalorder %v109, %v144
      %vm161 = vcmp.ge.s32.totalorder %v110, %v144
      %vm162 = vcmp.ge.s32.totalorder %v111, %v144
      %vm163 = vcmp.ge.s32.totalorder %v112, %v144
      %vm164 = vcmp.ge.s32.totalorder %v113, %v144
      %vm165 = vcmp.ge.s32.totalorder %v114, %v144
      %vm166 = vcmp.ge.s32.totalorder %v115, %v144
      %vm167 = vcmp.ge.s32.totalorder %v116, %v144
      %vm168 = vcmp.ge.s32.totalorder %v117, %v144
      %vm169 = vcmp.ge.s32.totalorder %v118, %v144
      %vm170 = vcmp.ge.s32.totalorder %v119, %v144
      %vm171 = vcmp.ge.s32.totalorder %v120, %v144
      %vm172 = vcmp.ge.s32.totalorder %v121, %v144
      %vm173 = vcmp.ge.s32.totalorder %v122, %v144
      %vm174 = vcmp.ge.s32.totalorder %v123, %v144
      %vm175 = vcmp.ge.s32.totalorder %v124, %v144
      %vm176 = vcmp.ge.s32.totalorder %v125, %v144
      %vm177 = vcmp.ge.s32.totalorder %v126, %v144
      %vm178 = vcmp.ge.s32.totalorder %v127, %v144
      %vm179 = vcmp.ge.s32.totalorder %v128, %v144
      %vm180 = vcmp.ge.s32.totalorder %v129, %v144
      %vm181 = vcmp.ge.s32.totalorder %v130, %v144
      %vm182 = vcmp.ge.s32.totalorder %v131, %v144
      %vm183 = vcmp.ge.s32.totalorder %v132, %v144
      %vm184 = vcmp.ge.s32.totalorder %v133, %v144
      %vm185 = vcmp.ge.s32.totalorder %v134, %v144
      %vm186 = vcmp.ge.s32.totalorder %v135, %v144
      %vm187 = vcmp.ge.s32.totalorder %v136, %v144
      %vm188 = vcmp.ge.s32.totalorder %v137, %v144
      %vm189 = vcmp.ge.s32.totalorder %v138, %v144
      %vm190 = vcmp.ge.s32.totalorder %v139, %v144
      %vm191 = vcmp.ge.s32.totalorder %v140, %v144
      %vm192 = vcmp.ge.s32.totalorder %v141, %v144
      %v193 = vadd.s32 %v144, 3
      %vm194 = vcmp.lt.s32.totalorder %v94, %v193
      %vm195 = vcmp.lt.s32.totalorder %v95, %v193
      %vm196 = vcmp.lt.s32.totalorder %v96, %v193
      %vm197 = vcmp.lt.s32.totalorder %v97, %v193
      %vm198 = vcmp.lt.s32.totalorder %v98, %v193
      %vm199 = vcmp.lt.s32.totalorder %v99, %v193
      %vm200 = vcmp.lt.s32.totalorder %v100, %v193
      %vm201 = vcmp.lt.s32.totalorder %v101, %v193
      %vm202 = vcmp.lt.s32.totalorder %v102, %v193
      %vm203 = vcmp.lt.s32.totalorder %v103, %v193
      %vm204 = vcmp.lt.s32.totalorder %v104, %v193
      %vm205 = vcmp.lt.s32.totalorder %v105, %v193
      %vm206 = vcmp.lt.s32.totalorder %v106, %v193
      %vm207 = vcmp.lt.s32.totalorder %v107, %v193
      %vm208 = vcmp.lt.s32.totalorder %v108, %v193
      %vm209 = vcmp.lt.s32.totalorder %v109, %v193
      %vm210 = vcmp.lt.s32.totalorder %v110, %v193
      %vm211 = vcmp.lt.s32.totalorder %v111, %v193
      %vm212 = vcmp.lt.s32.totalorder %v112, %v193
      %vm213 = vcmp.lt.s32.totalorder %v113, %v193
      %vm214 = vcmp.lt.s32.totalorder %v114, %v193
      %vm215 = vcmp.lt.s32.totalorder %v115, %v193
      %vm216 = vcmp.lt.s32.totalorder %v116, %v193
      %vm217 = vcmp.lt.s32.totalorder %v117, %v193
      %vm218 = vcmp.lt.s32.totalorder %v118, %v193
      %vm219 = vcmp.lt.s32.totalorder %v119, %v193
      %vm220 = vcmp.lt.s32.totalorder %v120, %v193
      %vm221 = vcmp.lt.s32.totalorder %v121, %v193
      %vm222 = vcmp.lt.s32.totalorder %v122, %v193
      %vm223 = vcmp.lt.s32.totalorder %v123, %v193
      %vm224 = vcmp.lt.s32.totalorder %v124, %v193
      %vm225 = vcmp.lt.s32.totalorder %v125, %v193
      %vm226 = vcmp.lt.s32.totalorder %v126, %v193
      %vm227 = vcmp.lt.s32.totalorder %v127, %v193
      %vm228 = vcmp.lt.s32.totalorder %v128, %v193
      %vm229 = vcmp.lt.s32.totalorder %v129, %v193
      %vm230 = vcmp.lt.s32.totalorder %v130, %v193
      %vm231 = vcmp.lt.s32.totalorder %v131, %v193
      %vm232 = vcmp.lt.s32.totalorder %v132, %v193
      %vm233 = vcmp.lt.s32.totalorder %v133, %v193
      %vm234 = vcmp.lt.s32.totalorder %v134, %v193
      %vm235 = vcmp.lt.s32.totalorder %v135, %v193
      %vm236 = vcmp.lt.s32.totalorder %v136, %v193
      %vm237 = vcmp.lt.s32.totalorder %v137, %v193
      %vm238 = vcmp.lt.s32.totalorder %v138, %v193
      %vm239 = vcmp.lt.s32.totalorder %v139, %v193
      %vm240 = vcmp.lt.s32.totalorder %v140, %v193
      %vm241 = vcmp.lt.s32.totalorder %v141, %v193
      %vm242 = vmand %vm145, %vm194
      %vm243 = vmand %vm146, %vm195
      %vm244 = vmand %vm147, %vm196
      %vm245 = vmand %vm148, %vm197
      %vm246 = vmand %vm149, %vm198
      %vm247 = vmand %vm150, %vm199
      %vm248 = vmand %vm151, %vm200
      %vm249 = vmand %vm152, %vm201
      %vm250 = vmand %vm153, %vm202
      %vm251 = vmand %vm154, %vm203
      %vm252 = vmand %vm155, %vm204
      %vm253 = vmand %vm156, %vm205
      %vm254 = vmand %vm157, %vm206
      %vm255 = vmand %vm158, %vm207
      %vm256 = vmand %vm159, %vm208
      %vm257 = vmand %vm160, %vm209
      %vm258 = vmand %vm161, %vm210
      %vm259 = vmand %vm162, %vm211
      %vm260 = vmand %vm163, %vm212
      %vm261 = vmand %vm164, %vm213
      %vm262 = vmand %vm165, %vm214
      %vm263 = vmand %vm166, %vm215
      %vm264 = vmand %vm167, %vm216
      %vm265 = vmand %vm168, %vm217
      %vm266 = vmand %vm169, %vm218
      %vm267 = vmand %vm170, %vm219
      %vm268 = vmand %vm171, %vm220
      %vm269 = vmand %vm172, %vm221
      %vm270 = vmand %vm173, %vm222
      %vm271 = vmand %vm174, %vm223
      %vm272 = vmand %vm175, %vm224
      %vm273 = vmand %vm176, %vm225
      %vm274 = vmand %vm177, %vm226
      %vm275 = vmand %vm178, %vm227
      %vm276 = vmand %vm179, %vm228
      %vm277 = vmand %vm180, %vm229
      %vm278 = vmand %vm181, %vm230
      %vm279 = vmand %vm182, %vm231
      %vm280 = vmand %vm183, %vm232
      %vm281 = vmand %vm184, %vm233
      %vm282 = vmand %vm185, %vm234
      %vm283 = vmand %vm186, %vm235
      %vm284 = vmand %vm187, %vm236
      %vm285 = vmand %vm188, %vm237
      %vm286 = vmand %vm189, %vm238
      %vm287 = vmand %vm190, %vm239
      %vm288 = vmand %vm191, %vm240
      %vm289 = vmand %vm192, %vm241
      %v290 = vsel %vm242, 1.0, 0.0
      %v291 = vsel %vm243, 1.0, 0.0
      %v292 = vsel %vm244, 1.0, 0.0
      %v293 = vsel %vm245, 1.0, 0.0
      %v294 = vsel %vm246, 1.0, 0.0
      %v295 = vsel %vm247, 1.0, 0.0
      %v296 = vsel %vm248, 1.0, 0.0
      %v297 = vsel %vm249, 1.0, 0.0
      %v298 = vsel %vm250, 1.0, 0.0
      %v299 = vsel %vm251, 1.0, 0.0
      %v300 = vsel %vm252, 1.0, 0.0
      %v301 = vsel %vm253, 1.0, 0.0
      %v302 = vsel %vm254, 1.0, 0.0
      %v303 = vsel %vm255, 1.0, 0.0
      %v304 = vsel %vm256, 1.0, 0.0
      %v305 = vsel %vm257, 1.0, 0.0
      %v306 = vsel %vm258, 1.0, 0.0
      %v307 = vsel %vm259, 1.0, 0.0
      %v308 = vsel %vm260, 1.0, 0.0
      %v309 = vsel %vm261, 1.0, 0.0
      %v310 = vsel %vm262, 1.0, 0.0
      %v311 = vsel %vm263, 1.0, 0.0
      %v312 = vsel %vm264, 1.0, 0.0
      %v313 = vsel %vm265, 1.0, 0.0
      %v314 = vsel %vm266, 1.0, 0.0
      %v315 = vsel %vm267, 1.0, 0.0
      %v316 = vsel %vm268, 1.0, 0.0
      %v317 = vsel %vm269, 1.0, 0.0
      %v318 = vsel %vm270, 1.0, 0.0
      %v319 = vsel %vm271, 1.0, 0.0
      %v320 = vsel %vm272, 1.0, 0.0
      %v321 = vsel %vm273, 1.0, 0.0
      %v322 = vsel %vm274, 1.0, 0.0
      %v323 = vsel %vm275, 1.0, 0.0
      %v324 = vsel %vm276, 1.0, 0.0
      %v325 = vsel %vm277, 1.0, 0.0
      %v326 = vsel %vm278, 1.0, 0.0
      %v327 = vsel %vm279, 1.0, 0.0
      %v328 = vsel %vm280, 1.0, 0.0
      %v329 = vsel %vm281, 1.0, 0.0
      %v330 = vsel %vm282, 1.0, 0.0
      %v331 = vsel %vm283, 1.0, 0.0
      %v332 = vsel %vm284, 1.0, 0.0
      %v333 = vsel %vm285, 1.0, 0.0
      %v334 = vsel %vm286, 1.0, 0.0
      %v335 = vsel %vm287, 1.0, 0.0
      %v336 = vsel %vm288, 1.0, 0.0
      %v337 = vsel %vm289, 1.0, 0.0
      %v338 = vpack.c.bf16 %v291, %v290
      %v339 = vpack.c.bf16 %v293, %v292
      %v340 = vpack.c.bf16 %v295, %v294
      %v341 = vpack.c.bf16 %v297, %v296
      %v342 = vpack.c.bf16 %v299, %v298
      %v343 = vpack.c.bf16 %v301, %v300
      %v344 = vpack.c.bf16 %v303, %v302
      %v345 = vpack.c.bf16 %v305, %v304
      %v346 = vpack.c.bf16 %v307, %v306
      %v347 = vpack.c.bf16 %v309, %v308
      %v348 = vpack.c.bf16 %v311, %v310
      %v349 = vpack.c.bf16 %v313, %v312
      %v350 = vpack.c.bf16 %v315, %v314
      %v351 = vpack.c.bf16 %v317, %v316
      %v352 = vpack.c.bf16 %v319, %v318
      %v353 = vpack.c.bf16 %v321, %v320
      %v354 = vpack.c.bf16 %v323, %v322
      %v355 = vpack.c.bf16 %v325, %v324
      %v356 = vpack.c.bf16 %v327, %v326
      %v357 = vpack.c.bf16 %v329, %v328
      %v358 = vpack.c.bf16 %v331, %v330
      %v359 = vpack.c.bf16 %v333, %v332
      %v360 = vpack.c.bf16 %v335, %v334
      %v361 = vpack.c.bf16 %v337, %v336
      %v386 = vunpack.c.l.b16 %v338
      %v387 = vunpack.c.h.b16 %v338
      %v388 = vunpack.c.l.b16 %v339
      %v389 = vunpack.c.h.b16 %v339
      %v390 = vunpack.c.l.b16 %v340
      %v391 = vunpack.c.h.b16 %v340
      %v392 = vunpack.c.l.b16 %v341
      %v393 = vunpack.c.h.b16 %v341
      %v394 = vunpack.c.l.b16 %v342
      %v395 = vunpack.c.h.b16 %v342
      %v396 = vunpack.c.l.b16 %v343
      %v397 = vunpack.c.h.b16 %v343
      %v398 = vunpack.c.l.b16 %v344
      %v399 = vunpack.c.h.b16 %v344
      %v400 = vunpack.c.l.b16 %v345
      %v401 = vunpack.c.h.b16 %v345
      %v402 = vunpack.c.l.b16 %v346
      %v403 = vunpack.c.h.b16 %v346
      %v404 = vunpack.c.l.b16 %v347
      %v405 = vunpack.c.h.b16 %v347
      %v406 = vunpack.c.l.b16 %v348
      %v407 = vunpack.c.h.b16 %v348
      %v408 = vunpack.c.l.b16 %v349
      %v409 = vunpack.c.h.b16 %v349
      %v410 = vunpack.c.l.b16 %v350
      %v411 = vunpack.c.h.b16 %v350
      %v412 = vunpack.c.l.b16 %v351
      %v413 = vunpack.c.h.b16 %v351
      %v414 = vunpack.c.l.b16 %v352
      %v415 = vunpack.c.h.b16 %v352
      %v416 = vunpack.c.l.b16 %v353
      %v417 = vunpack.c.h.b16 %v353
      %v418 = vunpack.c.l.b16 %v354
      %v419 = vunpack.c.h.b16 %v354
      %v420 = vunpack.c.l.b16 %v355
      %v421 = vunpack.c.h.b16 %v355
      %v422 = vunpack.c.l.b16 %v356
      %v423 = vunpack.c.h.b16 %v356
      %v424 = vunpack.c.l.b16 %v357
      %v425 = vunpack.c.h.b16 %v357
      %v426 = vunpack.c.l.b16 %v358
      %v427 = vunpack.c.h.b16 %v358
      %v428 = vunpack.c.l.b16 %v359
      %v429 = vunpack.c.h.b16 %v359
      %v430 = vunpack.c.l.b16 %v360
      %v431 = vunpack.c.h.b16 %v360
      %v432 = vunpack.c.l.b16 %v361
      %v433 = vunpack.c.h.b16 %v361
      %v434 = vpack.c.b16 %v386, %v386
      %v435 = vpack.c.b16 %v387, %v387
      %v436 = vpack.c.b16 %v388, %v388
      %v437 = vpack.c.b16 %v389, %v389
      %v438 = vpack.c.b16 %v390, %v390
      %v439 = vpack.c.b16 %v391, %v391
      %v440 = vpack.c.b16 %v392, %v392
      %v441 = vpack.c.b16 %v393, %v393
      %v442 = vpack.c.b16 %v394, %v394
      %v443 = vpack.c.b16 %v395, %v395
      %v444 = vpack.c.b16 %v396, %v396
      %v445 = vpack.c.b16 %v397, %v397
      %v446 = vpack.c.b16 %v398, %v398
      %v447 = vpack.c.b16 %v399, %v399
      %v448 = vpack.c.b16 %v400, %v400
      %v449 = vpack.c.b16 %v401, %v401
      %v450 = vpack.c.b16 %v402, %v402
      %v451 = vpack.c.b16 %v403, %v403
      %v452 = vpack.c.b16 %v404, %v404
      %v453 = vpack.c.b16 %v405, %v405
      %v454 = vpack.c.b16 %v406, %v406
      %v455 = vpack.c.b16 %v407, %v407
      %v456 = vpack.c.b16 %v408, %v408
      %v457 = vpack.c.b16 %v409, %v409
      %v458 = vpack.c.b16 %v410, %v410
      %v459 = vpack.c.b16 %v411, %v411
      %v460 = vpack.c.b16 %v412, %v412
      %v461 = vpack.c.b16 %v413, %v413
      %v462 = vpack.c.b16 %v414, %v414
      %v463 = vpack.c.b16 %v415, %v415
      %v464 = vpack.c.b16 %v416, %v416
      %v465 = vpack.c.b16 %v417, %v417
      %v466 = vpack.c.b16 %v418, %v418
      %v467 = vpack.c.b16 %v419, %v419
      %v468 = vpack.c.b16 %v420, %v420
      %v469 = vpack.c.b16 %v421, %v421
      %v470 = vpack.c.b16 %v422, %v422
      %v471 = vpack.c.b16 %v423, %v423
      %v472 = vpack.c.b16 %v424, %v424
      %v473 = vpack.c.b16 %v425, %v425
      %v474 = vpack.c.b16 %v426, %v426
      %v475 = vpack.c.b16 %v427, %v427
      %v476 = vpack.c.b16 %v428, %v428
      %v477 = vpack.c.b16 %v429, %v429
      %v478 = vpack.c.b16 %v430, %v430
      %v479 = vpack.c.b16 %v431, %v431
      %v480 = vpack.c.b16 %v432, %v432
      %v481 = vpack.c.b16 %v433, %v433
      %530 = vst [vmem:[#allocation2] sm:$0xf] %v434
      %531 = vst [vmem:[#allocation2 + $0x4] sm:$0xf] %v435
      %532 = vst [vmem:[#allocation2 + $0x8] sm:$0xf] %v436
      %533 = vst [vmem:[#allocation2 + $0xc] sm:$0xf] %v437
      %534 = vst [vmem:[#allocation2 + $0x10] sm:$0xf] %v438
      %535 = vst [vmem:[#allocation2 + $0x14] sm:$0xf] %v439
      %536 = vst [vmem:[#allocation2 + $0x18] sm:$0xf] %v440
      %537 = vst [vmem:[#allocation2 + $0x1c] sm:$0xf] %v441
      %538 = vst [vmem:[#allocation2 + $0x20] sm:$0xf] %v442
      %539 = vst [vmem:[#allocation2 + $0x24] sm:$0xf] %v443
      %540 = vst [vmem:[#allocation2 + $0x28] sm:$0xf] %v444
      %541 = vst [vmem:[#allocation2 + $0x2c] sm:$0xf] %v445
      %542 = vst [vmem:[#allocation2 + $0x30] sm:$0xf] %v446
      %543 = vst [vmem:[#allocation2 + $0x34] sm:$0xf] %v447
      %544 = vst [vmem:[#allocation2 + $0x38] sm:$0xf] %v448
      %545 = vst [vmem:[#allocation2 + $0x3c] sm:$0xf] %v449
      %546 = vst [vmem:[#allocation2 + $0x40] sm:$0xf] %v450
      %547 = vst [vmem:[#allocation2 + $0x44] sm:$0xf] %v451
      %548 = vst [vmem:[#allocation2 + $0x48] sm:$0xf] %v452
      %549 = vst [vmem:[#allocation2 + $0x4c] sm:$0xf] %v453
      %550 = vst [vmem:[#allocation2 + $0x50] sm:$0xf] %v454
      %551 = vst [vmem:[#allocation2 + $0x54] sm:$0xf] %v455
      %552 = vst [vmem:[#allocation2 + $0x58] sm:$0xf] %v456
      %553 = vst [vmem:[#allocation2 + $0x5c] sm:$0xf] %v457
      %554 = vst [vmem:[#allocation2 + $0x60] sm:$0xf] %v458
      %555 = vst [vmem:[#allocation2 + $0x64] sm:$0xf] %v459
      %556 = vst [vmem:[#allocation2 + $0x68] sm:$0xf] %v460
      %557 = vst [vmem:[#allocation2 + $0x6c] sm:$0xf] %v461
      %558 = vst [vmem:[#allocation2 + $0x70] sm:$0xf] %v462
      %559 = vst [vmem:[#allocation2 + $0x74] sm:$0xf] %v463
      %560 = vst [vmem:[#allocation2 + $0x78] sm:$0xf] %v464
      %561 = vst [vmem:[#allocation2 + $0x7c] sm:$0xf] %v465
      %562 = vst [vmem:[#allocation2 + $0x80] sm:$0xf] %v466
      %563 = vst [vmem:[#allocation2 + $0x84] sm:$0xf] %v467
      %564 = vst [vmem:[#allocation2 + $0x88] sm:$0xf] %v468
      %565 = vst [vmem:[#allocation2 + $0x8c] sm:$0xf] %v469
      %566 = vst [vmem:[#allocation2 + $0x90] sm:$0xf] %v470
      %567 = vst [vmem:[#allocation2 + $0x94] sm:$0xf] %v471
      %568 = vst [vmem:[#allocation2 + $0x98] sm:$0xf] %v472
      %569 = vst [vmem:[#allocation2 + $0x9c] sm:$0xf] %v473
      %570 = vst [vmem:[#allocation2 + $0xa0] sm:$0xf] %v474
      %571 = vst [vmem:[#allocation2 + $0xa4] sm:$0xf] %v475
      %572 = vst [vmem:[#allocation2 + $0xa8] sm:$0xf] %v476
      %573 = vst [vmem:[#allocation2 + $0xac] sm:$0xf] %v477
      %574 = vst [vmem:[#allocation2 + $0xb0] sm:$0xf] %v478
      %575 = vst [vmem:[#allocation2 + $0xb4] sm:$0xf] %v479
      %576 = vst [vmem:[#allocation2 + $0xb8] sm:$0xf] %v480
      %577 = vst [vmem:[#allocation2 + $0xbc] sm:$0xf] %v481
      %578 = vst [vmem:[#allocation3] sm:$0xff] 0.0
      %579 = vst [vmem:[#allocation4] sm:$0xff] 0.0
    $region29: #{tpu_custom_call.1} parent=1 // pred_fallthru
      _
    %v580 = vld [vmem:[#allocation5] sm:$0xff]
    %v581 = vld [vmem:[#allocation5 + $0x8] sm:$0xff]
    %v582 = vld [vmem:[#allocation5 + $0x10] sm:$0xff]
    %v583 = vld [vmem:[#allocation5 + $0x18] sm:$0xff]
    %v584 = vld [vmem:[#allocation5 + $0x20] sm:$0xff]
    %v585 = vld [vmem:[#allocation5 + $0x28] sm:$0xff]
    %v586 = vld [vmem:[#allocation5 + $0x30] sm:$0xff]
    %v587 = vld [vmem:[#allocation5 + $0x38] sm:$0xff]
    %v588 = vld [vmem:[#allocation5 + $0x40] sm:$0xff]
    %v589 = vld [vmem:[#allocation5 + $0x48] sm:$0xff]
    %v590 = vld [vmem:[#allocation5 + $0x50] sm:$0xff]
    %v591 = vld [vmem:[#allocation5 + $0x58] sm:$0xff]
    %v592 = vld [vmem:[#allocation8] sm:$0xff]
    %v593 = vld [vmem:[#allocation8 + $0x8] sm:$0xff]
    %v594 = vld [vmem:[#allocation8 + $0x10] sm:$0xff]
    %v595 = vld [vmem:[#allocation8 + $0x18] sm:$0xff]
    %v596 = vld [vmem:[#allocation8 + $0x20] sm:$0xff]
    %v597 = vld [vmem:[#allocation8 + $0x28] sm:$0xff]
    %v598 = vld [vmem:[#allocation8 + $0x30] sm:$0xff]
    %v599 = vld [vmem:[#allocation8 + $0x38] sm:$0xff]
    %v600 = vld [vmem:[#allocation8 + $0x40] sm:$0xff]
    %v601 = vld [vmem:[#allocation8 + $0x48] sm:$0xff]
    %v602 = vld [vmem:[#allocation8 + $0x50] sm:$0xff]
    %v603 = vld [vmem:[#allocation8 + $0x58] sm:$0xff]
    %v604 = vld [vmem:[#allocation10] sm:$0xff]
    %v605 = vld [vmem:[#allocation10 + $0x8] sm:$0xff]
    %v606 = vld [vmem:[#allocation10 + $0x10] sm:$0xff]
    %v607 = vld [vmem:[#allocation10 + $0x18] sm:$0xff]
    %v608 = vsub.f32 %v580, %v592
    %v609 = vsub.f32 %v581, %v593
    %v610 = vsub.f32 %v582, %v594
    %v611 = vsub.f32 %v583, %v595
    %v612 = vsub.f32 %v584, %v596
    %v613 = vsub.f32 %v585, %v597
    %v614 = vsub.f32 %v586, %v598
    %v615 = vsub.f32 %v587, %v599
    %v616 = vsub.f32 %v588, %v600
    %v617 = vsub.f32 %v589, %v601
    %v618 = vsub.f32 %v590, %v602
    %v619 = vsub.f32 %v591, %v603
    %v620 = vmul.f32 %v608, %v608
    %v621 = vmul.f32 %v609, %v609
    %v622 = vmul.f32 %v610, %v610
    %v623 = vmul.f32 %v611, %v611
    %v624 = vmul.f32 %v612, %v612
    %v625 = vmul.f32 %v613, %v613
    %v626 = vmul.f32 %v614, %v614
    %v627 = vmul.f32 %v615, %v615
    %v628 = vmul.f32 %v616, %v616
    %v629 = vmul.f32 %v617, %v617
    %v630 = vmul.f32 %v618, %v618
    %v631 = vmul.f32 %v619, %v619
    %v632 = vpack.c.bf16 %v623, %v620
    %v633 = vpack.c.bf16 %v624, %v621
    %v634 = vpack.c.bf16 %v625, %v622
    %v635 = vpack.c.bf16 %v629, %v626
    %v636 = vpack.c.bf16 %v630, %v627
    %v637 = vpack.c.bf16 %v631, %v628
    %v638 = vunpack.c.l.bf16 %v632
    %v639 = vunpack.c.l.bf16 %v633
    %v640 = vunpack.c.l.bf16 %v634
    %v641 = vunpack.c.h.bf16 %v632
    %v642 = vunpack.c.h.bf16 %v633
    %v643 = vunpack.c.h.bf16 %v634
    %v644 = vunpack.c.l.bf16 %v635
    %v645 = vunpack.c.l.bf16 %v636
    %v646 = vunpack.c.l.bf16 %v637
    %v647 = vunpack.c.h.bf16 %v635
    %v648 = vunpack.c.h.bf16 %v636
    %v649 = vunpack.c.h.bf16 %v637
    %v650 = vsub.f32 %v620, %v638
    %v651 = vsub.f32 %v621, %v639
    %v652 = vsub.f32 %v622, %v640
    %v653 = vsub.f32 %v623, %v641
    %v654 = vsub.f32 %v624, %v642
    %v655 = vsub.f32 %v625, %v643
    %v656 = vsub.f32 %v626, %v644
    %v657 = vsub.f32 %v627, %v645
    %v658 = vsub.f32 %v628, %v646
    %v659 = vsub.f32 %v629, %v647
    %v660 = vsub.f32 %v630, %v648
    %v661 = vsub.f32 %v631, %v649
    %v662 = vpack.c.bf16 %v653, %v650
    %v663 = vpack.c.bf16 %v654, %v651
    %v664 = vpack.c.bf16 %v655, %v652
    %v665 = vpack.c.bf16 %v659, %v656
    %v666 = vpack.c.bf16 %v660, %v657
    %v667 = vpack.c.bf16 %v661, %v658
    %v668 = vld [vmem:[#allocation2] sm:$0xf]
    %v669 = vld [vmem:[#allocation2 + $0x4] sm:$0xf]
    %v670 = vld [vmem:[#allocation2 + $0x8] sm:$0xf]
    %v671 = vld [vmem:[#allocation2 + $0xc] sm:$0xf]
    %v672 = vld [vmem:[#allocation2 + $0x10] sm:$0xf]
    %v673 = vld [vmem:[#allocation2 + $0x14] sm:$0xf]
    %v674 = vld [vmem:[#allocation2 + $0x18] sm:$0xf]
    %v675 = vld [vmem:[#allocation2 + $0x1c] sm:$0xf]
    %v676 = vld [vmem:[#allocation2 + $0x20] sm:$0xf]
    %v677 = vld [vmem:[#allocation2 + $0x24] sm:$0xf]
    %v678 = vld [vmem:[#allocation2 + $0x28] sm:$0xf]
    %v679 = vld [vmem:[#allocation2 + $0x2c] sm:$0xf]
    %v680 = vld [vmem:[#allocation2 + $0x30] sm:$0xf]
    %v681 = vld [vmem:[#allocation2 + $0x34] sm:$0xf]
    %v682 = vld [vmem:[#allocation2 + $0x38] sm:$0xf]
    %v683 = vld [vmem:[#allocation2 + $0x3c] sm:$0xf]
    %v684 = vld [vmem:[#allocation2 + $0x40] sm:$0xf]
    %v685 = vld [vmem:[#allocation2 + $0x44] sm:$0xf]
    %v686 = vld [vmem:[#allocation2 + $0x48] sm:$0xf]
    %v687 = vld [vmem:[#allocation2 + $0x4c] sm:$0xf]
    %v688 = vld [vmem:[#allocation2 + $0x50] sm:$0xf]
    %v689 = vld [vmem:[#allocation2 + $0x54] sm:$0xf]
    %v690 = vld [vmem:[#allocation2 + $0x58] sm:$0xf]
    %v691 = vld [vmem:[#allocation2 + $0x5c] sm:$0xf]
    %v692 = vld [vmem:[#allocation2 + $0x60] sm:$0xf]
    %v693 = vld [vmem:[#allocation2 + $0x64] sm:$0xf]
    %v694 = vld [vmem:[#allocation2 + $0x68] sm:$0xf]
    %v695 = vld [vmem:[#allocation2 + $0x6c] sm:$0xf]
    %v696 = vld [vmem:[#allocation2 + $0x70] sm:$0xf]
    %v697 = vld [vmem:[#allocation2 + $0x74] sm:$0xf]
    %v698 = vld [vmem:[#allocation2 + $0x78] sm:$0xf]
    %v699 = vld [vmem:[#allocation2 + $0x7c] sm:$0xf]
    %v700 = vld [vmem:[#allocation2 + $0x80] sm:$0xf]
    %v701 = vld [vmem:[#allocation2 + $0x84] sm:$0xf]
    %v702 = vld [vmem:[#allocation2 + $0x88] sm:$0xf]
    %v703 = vld [vmem:[#allocation2 + $0x8c] sm:$0xf]
    %v704 = vld [vmem:[#allocation2 + $0x90] sm:$0xf]
    %v705 = vld [vmem:[#allocation2 + $0x94] sm:$0xf]
    %v706 = vld [vmem:[#allocation2 + $0x98] sm:$0xf]
    %v707 = vld [vmem:[#allocation2 + $0x9c] sm:$0xf]
    %v708 = vld [vmem:[#allocation2 + $0xa0] sm:$0xf]
    %v709 = vld [vmem:[#allocation2 + $0xa4] sm:$0xf]
    %v710 = vld [vmem:[#allocation2 + $0xa8] sm:$0xf]
    %v711 = vld [vmem:[#allocation2 + $0xac] sm:$0xf]
    %v712 = vld [vmem:[#allocation2 + $0xb0] sm:$0xf]
    %v713 = vld [vmem:[#allocation2 + $0xb4] sm:$0xf]
    %v714 = vld [vmem:[#allocation2 + $0xb8] sm:$0xf]
    %v715 = vld [vmem:[#allocation2 + $0xbc] sm:$0xf]
    %v764 = vunpack.c.l.b16 %v668
    %v765 = vunpack.c.l.b16 %v669
    %v766 = vunpack.c.l.b16 %v670
    %v767 = vunpack.c.l.b16 %v671
    %v768 = vunpack.c.l.b16 %v672
    %v769 = vunpack.c.l.b16 %v673
    %v770 = vunpack.c.l.b16 %v674
    %v771 = vunpack.c.l.b16 %v675
    %v772 = vunpack.c.l.b16 %v676
    %v773 = vunpack.c.l.b16 %v677
    %v774 = vunpack.c.l.b16 %v678
    %v775 = vunpack.c.l.b16 %v679
    %v776 = vunpack.c.l.b16 %v680
    %v777 = vunpack.c.l.b16 %v681
    %v778 = vunpack.c.l.b16 %v682
    %v779 = vunpack.c.l.b16 %v683
    %v780 = vunpack.c.l.b16 %v684
    %v781 = vunpack.c.l.b16 %v685
    %v782 = vunpack.c.l.b16 %v686
    %v783 = vunpack.c.l.b16 %v687
    %v784 = vunpack.c.l.b16 %v688
    %v785 = vunpack.c.l.b16 %v689
    %v786 = vunpack.c.l.b16 %v690
    %v787 = vunpack.c.l.b16 %v691
    %v788 = vunpack.c.l.b16 %v692
    %v789 = vunpack.c.l.b16 %v693
    %v790 = vunpack.c.l.b16 %v694
    %v791 = vunpack.c.l.b16 %v695
    %v792 = vunpack.c.l.b16 %v696
    %v793 = vunpack.c.l.b16 %v697
    %v794 = vunpack.c.l.b16 %v698
    %v795 = vunpack.c.l.b16 %v699
    %v796 = vunpack.c.l.b16 %v700
    %v797 = vunpack.c.l.b16 %v701
    %v798 = vunpack.c.l.b16 %v702
    %v799 = vunpack.c.l.b16 %v703
    %v800 = vunpack.c.l.b16 %v704
    %v801 = vunpack.c.l.b16 %v705
    %v802 = vunpack.c.l.b16 %v706
    %v803 = vunpack.c.l.b16 %v707
    %v804 = vunpack.c.l.b16 %v708
    %v805 = vunpack.c.l.b16 %v709
    %v806 = vunpack.c.l.b16 %v710
    %v807 = vunpack.c.l.b16 %v711
    %v808 = vunpack.c.l.b16 %v712
    %v809 = vunpack.c.l.b16 %v713
    %v810 = vunpack.c.l.b16 %v714
    %v811 = vunpack.c.l.b16 %v715
    %v812 = vpack.c.b16 %v765, %v764
    %v813 = vpack.c.b16 %v767, %v766
    %v814 = vpack.c.b16 %v769, %v768
    %v815 = vpack.c.b16 %v771, %v770
    %v816 = vpack.c.b16 %v773, %v772
    %v817 = vpack.c.b16 %v775, %v774
    %v818 = vpack.c.b16 %v777, %v776
    %v819 = vpack.c.b16 %v779, %v778
    %v820 = vpack.c.b16 %v781, %v780
    %v821 = vpack.c.b16 %v783, %v782
    %v822 = vpack.c.b16 %v785, %v784
    %v823 = vpack.c.b16 %v787, %v786
    %v824 = vpack.c.b16 %v789, %v788
    %v825 = vpack.c.b16 %v791, %v790
    %v826 = vpack.c.b16 %v793, %v792
    %v827 = vpack.c.b16 %v795, %v794
    %v828 = vpack.c.b16 %v797, %v796
    %v829 = vpack.c.b16 %v799, %v798
    %v830 = vpack.c.b16 %v801, %v800
    %v831 = vpack.c.b16 %v803, %v802
    %v832 = vpack.c.b16 %v805, %v804
    %v833 = vpack.c.b16 %v807, %v806
    %v834 = vpack.c.b16 %v809, %v808
    %v835 = vpack.c.b16 %v811, %v810
    %860 = vmatprep.subr.bf16.mxu0 0
    %861 = vmatpush1.bf16.msra.mxu0 %v819
    %862 = vmatprep.subr.bf16.mxu0 0
    %863 = vmatpush1.bf16.msra.mxu0 %v818
    %864 = vmatprep.subr.bf16.mxu0 0
    %865 = vmatpush1.bf16.msra.mxu0 %v817
    %866 = vmatprep.subr.bf16.mxu0 0
    %867 = vmatpush1.bf16.msra.mxu0 %v816
    %868 = vmatprep.subr.bf16.mxu0 0
    %869 = vmatpush1.bf16.msra.mxu0 %v815
    %870 = vmatprep.subr.bf16.mxu0 0
    %871 = vmatpush1.bf16.msra.mxu0 %v814
    %872 = vmatprep.subr.bf16.mxu0 0
    %873 = vmatpush1.bf16.msra.mxu0 %v813
    %874 = vmatprep.subr.bf16.mxu0 0
    %875 = vmatpush1.bf16.msra.mxu0 %v812
    %876 = vmatprep.subr.bf16.mxu0 0
    %877 = vmatpush2.bf16.msra.mxu0 %v827
    %878 = vmatprep.subr.bf16.mxu0 0
    %879 = vmatpush2.bf16.msra.mxu0 %v826
    %880 = vmatprep.subr.bf16.mxu0 0
    %881 = vmatpush2.bf16.msra.mxu0 %v825
    %882 = vmatprep.subr.bf16.mxu0 0
    %883 = vmatpush2.bf16.msra.mxu0 %v824
    %884 = vmatprep.subr.bf16.mxu0 0
    %885 = vmatpush2.bf16.msra.mxu0 %v823
    %886 = vmatprep.subr.bf16.mxu0 0
    %887 = vmatpush2.bf16.msra.mxu0 %v822
    %888 = vmatprep.subr.bf16.mxu0 0
    %889 = vmatpush2.bf16.msra.mxu0 %v821
    %890 = vmatprep.subr.bf16.mxu0 0
    %891 = vmatpush2.bf16.msra.mxu0 %v820
    %892 = vmatprep.mubr.bf16.mxu0 %v663
    %893 = vmatmul.mubr.bf16.gmra.mxu0 %v662
    %v894 = vpop.f32.mrf.mxu0
    %v895 = vadd.f32 0.0, %v894
    %v896 = vpop.f32.mrf.mxu0
    %v897 = vpop.f32.mrf.mxu0
    %v898 = vadd.f32 0.0, %v897
    %v899 = vpop.f32.mrf.mxu0
    %900 = vmatprep.mubr.bf16.mxu0 %v666
    %901 = vmatmul.mubr.bf16.gmra.mxu0 %v665
    %v902 = vpop.f32.mrf.mxu0
    %v903 = vadd.f32 0.0, %v902
    %v904 = vpop.f32.mrf.mxu0
    %v905 = vpop.f32.mrf.mxu0
    %v906 = vadd.f32 0.0, %v905
    %v907 = vpop.f32.mrf.mxu0
    %908 = vdwg.mxu0
    %909 = vmatprep.subr.bf16.mxu0 0
    %910 = vmatpush1.bf16.msra.mxu0 %v835
    %911 = vmatprep.subr.bf16.mxu0 0
    %912 = vmatpush1.bf16.msra.mxu0 %v834
    %913 = vmatprep.subr.bf16.mxu0 0
    %914 = vmatpush1.bf16.msra.mxu0 %v833
    %915 = vmatprep.subr.bf16.mxu0 0
    %916 = vmatpush1.bf16.msra.mxu0 %v832
    %917 = vmatprep.subr.bf16.mxu0 0
    %918 = vmatpush1.bf16.msra.mxu0 %v831
    %919 = vmatprep.subr.bf16.mxu0 0
    %920 = vmatpush1.bf16.msra.mxu0 %v830
    %921 = vmatprep.subr.bf16.mxu0 0
    %922 = vmatpush1.bf16.msra.mxu0 %v829
    %923 = vmatprep.subr.bf16.mxu0 0
    %924 = vmatpush1.bf16.msra.mxu0 %v828
    %925 = vmatprep.subr.bf16.mxu0 0
    %926 = vmatpush2.bf16.msra.mxu0 0
    %927 = vmatprep.subr.bf16.mxu0 0
    %928 = vmatpush2.bf16.msra.mxu0 0
    %929 = vmatprep.subr.bf16.mxu0 0
    %930 = vmatpush2.bf16.msra.mxu0 0
    %931 = vmatprep.subr.bf16.mxu0 0
    %932 = vmatpush2.bf16.msra.mxu0 0
    %933 = vmatprep.subr.bf16.mxu0 0
    %934 = vmatpush2.bf16.msra.mxu0 0
    %935 = vmatprep.subr.bf16.mxu0 0
    %936 = vmatpush2.bf16.msra.mxu0 0
    %937 = vmatprep.subr.bf16.mxu0 0
    %938 = vmatpush2.bf16.msra.mxu0 0
    %939 = vmatprep.subr.bf16.mxu0 0
    %940 = vmatpush2.bf16.msra.mxu0 0
    %941 = vmatprep.mubr.bf16.mxu0 0
    %942 = vmatmul.mubr.bf16.gmra.mxu0 %v664
    %v943 = vpop.f32.mrf.mxu0
    %v944 = vadd.f32 %v895, %v943
    %v945 = vpop.f32.mrf.mxu0
    %v946 = vpop.f32.mrf.mxu0
    %v947 = vadd.f32 %v898, %v946
    %v948 = vpop.f32.mrf.mxu0
    %949 = vmatprep.mubr.bf16.mxu0 0
    %950 = vmatmul.mubr.bf16.gmra.mxu0 %v667
    %v951 = vpop.f32.mrf.mxu0
    %v952 = vadd.f32 %v903, %v951
    %v953 = vpop.f32.mrf.mxu0
    %v954 = vpop.f32.mrf.mxu0
    %v955 = vadd.f32 %v906, %v954
    %v956 = vpop.f32.mrf.mxu0
    %957 = vdwg.mxu0
    %958 = vmatprep.subr.bf16.mxu0 0
    %959 = vmatpush1.bf16.msra.mxu0 %v819
    %960 = vmatprep.subr.bf16.mxu0 0
    %961 = vmatpush1.bf16.msra.mxu0 %v818
    %962 = vmatprep.subr.bf16.mxu0 0
    %963 = vmatpush1.bf16.msra.mxu0 %v817
    %964 = vmatprep.subr.bf16.mxu0 0
    %965 = vmatpush1.bf16.msra.mxu0 %v816
    %966 = vmatprep.subr.bf16.mxu0 0
    %967 = vmatpush1.bf16.msra.mxu0 %v815
    %968 = vmatprep.subr.bf16.mxu0 0
    %969 = vmatpush1.bf16.msra.mxu0 %v814
    %970 = vmatprep.subr.bf16.mxu0 0
    %971 = vmatpush1.bf16.msra.mxu0 %v813
    %972 = vmatprep.subr.bf16.mxu0 0
    %973 = vmatpush1.bf16.msra.mxu0 %v812
    %974 = vmatprep.subr.bf16.mxu0 0
    %975 = vmatpush2.bf16.msra.mxu0 %v827
    %976 = vmatprep.subr.bf16.mxu0 0
    %977 = vmatpush2.bf16.msra.mxu0 %v826
    %978 = vmatprep.subr.bf16.mxu0 0
    %979 = vmatpush2.bf16.msra.mxu0 %v825
    %980 = vmatprep.subr.bf16.mxu0 0
    %981 = vmatpush2.bf16.msra.mxu0 %v824
    %982 = vmatprep.subr.bf16.mxu0 0
    %983 = vmatpush2.bf16.msra.mxu0 %v823
    %984 = vmatprep.subr.bf16.mxu0 0
    %985 = vmatpush2.bf16.msra.mxu0 %v822
    %986 = vmatprep.subr.bf16.mxu0 0
    %987 = vmatpush2.bf16.msra.mxu0 %v821
    %988 = vmatprep.subr.bf16.mxu0 0
    %989 = vmatpush2.bf16.msra.mxu0 %v820
    %990 = vmatprep.mubr.bf16.mxu0 %v633
    %991 = vmatmul.mubr.bf16.gmra.mxu0 %v632
    %v992 = vpop.f32.mrf.mxu0
    %v993 = vadd.f32 %v944, %v992
    %v994 = vpop.f32.mrf.mxu0
    %v995 = vpop.f32.mrf.mxu0
    %v996 = vadd.f32 %v947, %v995
    %v997 = vpop.f32.mrf.mxu0
    %998 = vmatprep.mubr.bf16.mxu0 %v636
    %999 = vmatmul.mubr.bf16.gmra.mxu0 %v635
    %v1000 = vpop.f32.mrf.mxu0
    %v1001 = vadd.f32 %v952, %v1000
    %v1002 = vpop.f32.mrf.mxu0
    %v1003 = vpop.f32.mrf.mxu0
    %v1004 = vadd.f32 %v955, %v1003
    %v1005 = vpop.f32.mrf.mxu0
    %1006 = vdwg.mxu0
    %1007 = vmatprep.subr.bf16.mxu0 0
    %1008 = vmatpush1.bf16.msra.mxu0 %v835
    %1009 = vmatprep.subr.bf16.mxu0 0
    %1010 = vmatpush1.bf16.msra.mxu0 %v834
    %1011 = vmatprep.subr.bf16.mxu0 0
    %1012 = vmatpush1.bf16.msra.mxu0 %v833
    %1013 = vmatprep.subr.bf16.mxu0 0
    %1014 = vmatpush1.bf16.msra.mxu0 %v832
    %1015 = vmatprep.subr.bf16.mxu0 0
    %1016 = vmatpush1.bf16.msra.mxu0 %v831
    %1017 = vmatprep.subr.bf16.mxu0 0
    %1018 = vmatpush1.bf16.msra.mxu0 %v830
    %1019 = vmatprep.subr.bf16.mxu0 0
    %1020 = vmatpush1.bf16.msra.mxu0 %v829
    %1021 = vmatprep.subr.bf16.mxu0 0
    %1022 = vmatpush1.bf16.msra.mxu0 %v828
    %1023 = vmatprep.subr.bf16.mxu0 0
    %1024 = vmatpush2.bf16.msra.mxu0 0
    %1025 = vmatprep.subr.bf16.mxu0 0
    %1026 = vmatpush2.bf16.msra.mxu0 0
    %1027 = vmatprep.subr.bf16.mxu0 0
    %1028 = vmatpush2.bf16.msra.mxu0 0
    %1029 = vmatprep.subr.bf16.mxu0 0
    %1030 = vmatpush2.bf16.msra.mxu0 0
    %1031 = vmatprep.subr.bf16.mxu0 0
    %1032 = vmatpush2.bf16.msra.mxu0 0
    %1033 = vmatprep.subr.bf16.mxu0 0
    %1034 = vmatpush2.bf16.msra.mxu0 0
    %1035 = vmatprep.subr.bf16.mxu0 0
    %1036 = vmatpush2.bf16.msra.mxu0 0
    %1037 = vmatprep.subr.bf16.mxu0 0
    %1038 = vmatpush2.bf16.msra.mxu0 0
    %1039 = vmatprep.mubr.bf16.mxu0 0
    %1040 = vmatmul.mubr.bf16.gmra.mxu0 %v634
    %v1041 = vpop.f32.mrf.mxu0
    %v1042 = vadd.f32 %v993, %v1041
    %v1043 = vpop.f32.mrf.mxu0
    %v1044 = vpop.f32.mrf.mxu0
    %v1045 = vadd.f32 %v996, %v1044
    %v1046 = vpop.f32.mrf.mxu0
    %1047 = vmatprep.mubr.bf16.mxu0 0
    %1048 = vmatmul.mubr.bf16.gmra.mxu0 %v637
    %v1049 = vpop.f32.mrf.mxu0
    %v1050 = vadd.f32 %v1001, %v1049
    %v1051 = vpop.f32.mrf.mxu0
    %v1052 = vpop.f32.mrf.mxu0
    %v1053 = vadd.f32 %v1004, %v1052
    %v1054 = vpop.f32.mrf.mxu0
    %1055 = vdwg.mxu0
    %v1056 = vadd.f32 %v604, 1.0
    %v1057 = vadd.f32 %v605, 1.0
    %v1058 = vadd.f32 %v606, 1.0
    %v1059 = vadd.f32 %v607, 1.0
    %v1060 = vrcp.pop %v1056
    %v1061 = vrcp.pop %v1057
    %v1062 = vrcp.pop %v1058
    %v1063 = vrcp.pop %v1059
    %v1064 = vmul.f32 %v1042, %v1060
    %v1065 = vmul.f32 %v1045, %v1061
    %v1066 = vmul.f32 %v1050, %v1062
    %v1067 = vmul.f32 %v1053, %v1063
    %v1068 = vlog2.pop %v604
    %v1069 = vmul.f32 %v1068, 0.6931472
    %v1070 = vlog2.pop %v605
    %v1071 = vmul.f32 %v1070, 0.6931472
    %v1072 = vlog2.pop %v606
    %v1073 = vmul.f32 %v1072, 0.6931472
    %v1074 = vlog2.pop %v607
    %v1075 = vmul.f32 %v1074, 0.6931472
    %v1076 = vld [vmem:[#allocation3] sm:$0xff]
    %v1077 = vadd.f32 %v1064, %v1065
    %v1078 = vadd.f32 %v1077, %v1066
    %v1079 = vadd.f32 %v1078, %v1067
    %v1080 = vadd.f32 %v1076, %v1079
    %1081 = vst [vmem:[#allocation3] sm:$0xff] %v1080
    %v1082 = vld [vmem:[#allocation4] sm:$0xff]
    %v1083 = vadd.f32 %v1069, %v1071
    %v1084 = vadd.f32 %v1083, %v1073
    %v1085 = vadd.f32 %v1084, %v1075
    %v1086 = vadd.f32 %v1082, %v1085
    %1087 = vst [vmem:[#allocation4] sm:$0xff] %v1086
    // Predicated region
    $region30: #{tpu_custom_call.1} parent=1 // pred_check
      %p1088 = pneg %p89
    $region31: #{tpu_custom_call.1} parent=1 // pred_check_branch
      %1090 = sbr.rel (%p1088) target = $region33
    $region32: #{tpu_custom_call.1} parent=1 // pred_region
      %v1091 = vld [vmem:[#allocation3] sm:$0xff]
      %1092 = vadd.xlane.f32.xlu0 %v1091
      %v1093 = vpop.xlane.xlu0 %1092
      %v1094 = vrot.slane %v1093, 4
      %v1095 = vadd.f32 %v1093, %v1094
      %v1096 = vrot.slane %v1095, 2
      %v1097 = vadd.f32 %v1095, %v1096
      %v1098 = vrot.slane %v1097, 1
      %v1099 = vadd.f32 %v1097, %v1098
      %s1100 = vtos %v1099
      %s1101 = scalar_lea.smem [#allocation11], 0
      %1102 = sst [smem:[%s1101]] %s1100
      %v1103 = vld [vmem:[#allocation4] sm:$0xff]
      %1104 = vadd.xlane.f32.xlu0 %v1103
      %v1105 = vpop.xlane.xlu0 %1104
      %v1106 = vrot.slane %v1105, 4
      %v1107 = vadd.f32 %v1105, %v1106
      %v1108 = vrot.slane %v1107, 2
      %v1109 = vadd.f32 %v1107, %v1108
      %v1110 = vrot.slane %v1109, 1
      %v1111 = vadd.f32 %v1109, %v1110
      %s1112 = vtos %v1111
      %s1113 = scalar_lea.smem [#allocation11], 1
      %1114 = sst [smem:[%s1113]] %s1112
    $region33: #{tpu_custom_call.1} parent=1 // pred_fallthru
      _
    // Predicated region
    $region34: #{tpu_custom_call.1} parent=1 // pred_check
      _
    $region35: #{tpu_custom_call.1} parent=1 // pred_check_branch
      %1116 = sbr.rel (0) target = $region37
    $region36: #{tpu_custom_call.1} parent=1 // pred_region
      %s1118 = ssub.s32 16, 16
      %1119 = vsyncadd [#allocation7], %s1118
      %1122 = dma.smem_to_hbm [#allocation11], 16, %s3, [#allocation7]
    $region37: #{tpu_custom_call.1} parent=1 // pred_fallthru
      _
    // Predicated region
    $region38: #{tpu_custom_call.1} parent=1 // pred_check
      _
    $region39: #{tpu_custom_call.1} parent=1 // pred_check_branch
      %1124 = sbr.rel (0) target = $region41
    $region40: #{tpu_custom_call.1} parent=1 // pred_region
      %1125 = dma.done [#allocation7], 16
    $region41: #{tpu_custom_call.1} parent=1 // pred_fallthru
      _
    %1126 = sfence
    %1127 = vsyncpa [#allocation6], 1
    %1128 = vsyncpa [#allocation9], 1
    %1129 = vsyncpa [#allocation7], 1

</llo_original>
